<compile_context>
chip_gen: v5e
topology: v5e:2x2
jax: 0.10.0
libtpu: 0.0.40
codegen_flags: <defaults>
</compile_context>

<pallas_src>
from functools import partial

import numpy as np
import jax
import jax.numpy as jnp
from jax.experimental import pallas as pl
from jax.experimental.pallas import tpu as pltpu


def make_dense_interp_weight(seq_len: int, factor: int) -> jnp.ndarray:
    """Deterministic construction of W, identical to the PyTorch __init__."""
    W = np.zeros((factor, seq_len), dtype=np.float32)
    for t in range(seq_len):
        s = np.float32(factor * (t + 1) / seq_len)
        for m in range(factor):
            tmp = np.float32(1.0 - np.abs(s - (1 + m)) / factor)
            W[m, t] = np.power(tmp, 2, dtype=np.float32)
    return jnp.asarray(W)


def _dense_interp_kernel(w_ref, x_ref, o_ref, *acc,
                         factor, seq_len, s_tile, n_s_steps):
    """One (TB, TS, DT) x block -> (TB, M, DT) lane-dense output block.

    w_ref : SMEM (factor*seq_len,) f32 -- scalar operands for VPU multiplies.
    x_ref : VMEM (TB, TS, DT)          -- streamed input block.
    o_ref : VMEM (TB, M, DT)           -- written on the last S step only.
    acc   : optional VMEM f32 (TB, M, DT) scratch when the S axis is tiled.
    """
    s_base = pl.program_id(2) * s_tile if n_s_steps > 1 else 0

    # Unrolled scalar-accumulate contraction over the local S tile:
    #   parts[m] = sum_s W[m, s] * x[:, s, :]
    # Each x slice is read from VMEM once and upcast to f32 transiently;
    # everything stays on the VPU (no MXU, no XLU reduce, no 4-D broadcast).
    parts = [None] * factor
    for sl in range(s_tile):
        x_s = x_ref[:, sl, :].astype(jnp.float32)           # (TB, DT) f32
        for m in range(factor):
            w_ms = w_ref[m * seq_len + s_base + sl]          # SMEM f32 scalar
            term = x_s * w_ms
            parts[m] = term if parts[m] is None else parts[m] + term

    u = jnp.stack(parts, axis=1)                             # (TB, M, DT) f32

    if n_s_steps == 1:
        # Common case (short seq_len): write straight to the output block.
        o_ref[...] = u.astype(o_ref.dtype)
    else:
        acc_ref = acc[0]
        s_idx = pl.program_id(2)

        @pl.when(s_idx == 0)
        def _():
            acc_ref[...] = u

        @pl.when(s_idx > 0)
        def _():
            acc_ref[...] += u

        @pl.when(s_idx == n_s_steps - 1)
        def _():
            o_ref[...] = acc_ref[...].astype(o_ref.dtype)


def _vmem_capacity_bytes() -> int:
    try:
        return int(pltpu.get_tpu_info().vmem_capacity_bytes)
    except Exception:
        return 64 * 1024 * 1024      # conservative (v7x per-TensorCore VMEM)


def _choose_seq_tile(S: int) -> int:
    # Tile long sequences so the x block stays bounded regardless of seq_len.
    if S <= 1024:
        return S
    for ts in range(512, 7, -8):      # multiple of 8 (sublane tiling), divides S
        if S % ts == 0:
            return ts
    return S                          # awkward S: fall back to full-S blocks


def _choose_feature_tile(D: int, TS: int, itemsize: int, x_tile_target: int) -> int:
    # Prefer full-D blocks (contiguous HBM DMAs); tile D only when even an
    # 8-row batch tile at full D would blow the byte target, and only into
    # multiples of 128 so stores stay unmasked.
    if D % 128 != 0 or 8 * TS * D * itemsize <= x_tile_target:
        return D
    dt = (x_tile_target // (8 * TS * itemsize)) // 128 * 128
    dt = max(128, min(dt, D))
    while D % dt:
        dt -= 128
    return max(128, dt)


def _choose_batch_tile(B: int, TS: int, DT: int, nd: int, itemsize: int,
                       x_tile_target: int):
    """Byte-targeted batch tile; returns (TB, batch_pad)."""
    row_bytes = max(1, TS * DT * itemsize)
    tb = max(1, min(B, x_tile_target // row_bytes))
    # Keep >= ~4 parallel grid steps when the problem allows, so v7x's two
    # TensorCores both get work (batch/feature axes are 'parallel').
    min_batch_steps = max(1, -(-4 // nd))
    if tb > 1 and pl.cdiv(B, tb) < min_batch_steps:
        tb = max(1, pl.cdiv(B, min(min_batch_steps, B)))
    if B % tb == 0:
        return tb, 0
    # Prefer a near-target divisor of B over padding (padding costs an extra
    # HBM pass over x in the wrapper).
    d = tb
    while d > 1 and B % d:
        d -= 1
    if 2 * d >= tb:
        return d, 0
    return tb, pl.cdiv(B, tb) * tb - B


def dense_interpolation(x: jnp.ndarray, W: jnp.ndarray,
                        *, batch_tile: int | None = None,
                        d_tile: int | None = None,
                        transpose_output: bool = True) -> jnp.ndarray:
    """x: (B, S, D), W: (M, S) -> (B, D, M)  (same as the PyTorch forward).

    Set transpose_output=False to get the kernel-native (B, M, D) layout and
    skip the extra HBM pass when the consumer can accept it.
    """
    B, S, D = x.shape
    M, S2 = W.shape
    assert S == S2, "seq_len mismatch between x and W"
    itemsize = x.dtype.itemsize

    # Generation-aware byte targets (~8 MiB x tiles on v5e/v6e, ~4 MiB on v7x).
    vmem_cap = _vmem_capacity_bytes()
    x_tile_target = max(1 << 20, min(8 << 20, vmem_cap // 16))

    TS = _choose_seq_tile(S)
    n_s = S // TS

    if d_tile is None:
        DT = _choose_feature_tile(D, TS, itemsize, x_tile_target)
    else:
        DT = d_tile
    assert D % DT == 0, "d_tile must divide D"
    nd = D // DT

    if batch_tile is None:
        TB, pad_b = _choose_batch_tile(B, TS, DT, nd, itemsize, x_tile_target)
    else:
        TB = max(1, min(batch_tile, B))
        pad_b = pl.cdiv(B, TB) * TB - B

    x_in = jnp.pad(x, ((0, pad_b), (0, 0), (0, 0))) if pad_b else x
    Bp = B + pad_b
    grid = (Bp // TB, nd, n_s)

    # VMEM footprint estimate: double-buffered x/out blocks + f32 accumulator
    # + live f32 partials inside the kernel body; leave 2x headroom but never
    # ask for more than ~3/4 of physical VMEM.
    x_blk = TB * TS * DT * itemsize
    o_blk = TB * M * DT * itemsize
    acc_b = TB * M * DT * 4 if n_s > 1 else 0
    tmp_b = (M + 2) * TB * DT * 4
    need = 2 * x_blk + 2 * o_blk + acc_b + tmp_b
    vmem_limit = int(min(max(2 * need, 32 << 20), vmem_cap * 3 // 4))

    kernel = partial(_dense_interp_kernel, factor=M, seq_len=S,
                     s_tile=TS, n_s_steps=n_s)
    scratch = [pltpu.VMEM((TB, M, DT), jnp.float32)] if n_s > 1 else []

    W_flat = W.astype(jnp.float32).reshape(M * S)

    out_bmd = pl.pallas_call(
        kernel,
        out_shape=jax.ShapeDtypeStruct((Bp, M, D), x.dtype),
        grid_spec=pltpu.PrefetchScalarGridSpec(
            num_scalar_prefetch=0,
            grid=grid,
            in_specs=[
                # 32 W scalars in SMEM (shared across the whole grid).
                pl.BlockSpec(memory_space=pltpu.MemorySpace.SMEM),
                # Streamed x block: TB batch rows x TS seq steps x DT features.
                pl.BlockSpec((TB, TS, DT), lambda b, d, s: (b, s, d)),
            ],
            # Lane-dense output block; constant over the S (reduction) axis.
            out_specs=pl.BlockSpec((TB, M, DT), lambda b, d, s: (b, 0, d)),
            scratch_shapes=scratch,
        ),
        compiler_params=pltpu.CompilerParams(
            dimension_semantics=("parallel", "parallel", "arbitrary"),
            vmem_limit_bytes=vmem_limit,
        ),
        cost_estimate=pl.CostEstimate(
            flops=2 * Bp * M * S * D,
            transcendentals=0,
            bytes_accessed=int(Bp * S * D * itemsize + M * S * 4
                               + Bp * M * D * itemsize),
        ),
    )(W_flat, x_in)

    if pad_b:
        out_bmd = out_bmd[:B]
    if not transpose_output:
        return out_bmd
    # Module semantics: bmm result transposed to (B, D, M).  Kept outside the
    # kernel so in-kernel stores stay lane-dense on D.
    return jnp.transpose(out_bmd, (0, 2, 1))


if __name__ == "__main__":
    # Small shapes consistent with the module: batch=8, seq_len=8, hidden=32, factor=4.
    B, S, D, FACTOR = 8, 8, 32, 4

    key = jax.random.PRNGKey(0)
    x = jax.random.normal(key, (B, S, D), dtype=jnp.float32)

    W = make_dense_interp_weight(seq_len=S, factor=FACTOR)

    out = dense_interpolation(x, W)          # heuristic tiling -> 4 batch steps
    out = jax.block_until_ready(out)

    # Reference (plain JAX), same math as torch.bmm + transpose.
    ref = jnp.einsum("ms,bsd->bdm", W, x)
    assert out.shape == (B, D, FACTOR), out.shape
    np.testing.assert_allclose(np.asarray(out), np.asarray(ref), rtol=1e-5, atol=1e-5)

    print("KERNEL_OK")
</pallas_src>

<mosaic_0001>
module attributes {stable_mosaic.version = 11 : i64} {
  func.func @_dense_interp_kernel(%arg0: i32, %arg1: i32, %arg2: i32, %arg3: memref<32xf32, #tpu.memory_space<smem>>, %arg4: memref<2x8x32xf32, #tpu.memory_space<vmem>>, %arg5: memref<2x4x32xf32, #tpu.memory_space<vmem>>) attributes {dimension_semantics = [#tpu.dimension_semantics<parallel>, #tpu.dimension_semantics<parallel>, #tpu.dimension_semantics<arbitrary>], iteration_bounds = array<i64: 4, 1, 1>, scalar_prefetch = 0 : i64, scratch_operands = 0 : i64, tpu.core_type = #tpu.core_type<tc>, window_params = [{transform_indices = @transform_0, window_bounds = array<i64: 32>}, {transform_indices = @transform_1, window_bounds = array<i64: 2, 8, 32>}, {transform_indices = @transform_2, window_bounds = array<i64: 2, 4, 32>}]} {
    %c0 = arith.constant 0 : index
    %c0_0 = arith.constant 0 : index
    %c0_1 = arith.constant 0 : index
    %0 = vector.load %arg4[%c0, %c0_0, %c0_1] : memref<2x8x32xf32, #tpu.memory_space<vmem>>, vector<2x1x32xf32>
    %1 = vector.shape_cast %0 : vector<2x1x32xf32> to vector<2x32xf32>
    %c0_2 = arith.constant 0 : index
    %2 = memref.load %arg3[%c0_2] : memref<32xf32, #tpu.memory_space<smem>>
    %3 = vector.broadcast %2 : f32 to vector<2x32xf32>
    %4 = arith.mulf %1, %3 : vector<2x32xf32>
    %c8 = arith.constant 8 : index
    %5 = memref.load %arg3[%c8] : memref<32xf32, #tpu.memory_space<smem>>
    %6 = vector.broadcast %5 : f32 to vector<2x32xf32>
    %7 = arith.mulf %1, %6 : vector<2x32xf32>
    %c16 = arith.constant 16 : index
    %8 = memref.load %arg3[%c16] : memref<32xf32, #tpu.memory_space<smem>>
    %9 = vector.broadcast %8 : f32 to vector<2x32xf32>
    %10 = arith.mulf %1, %9 : vector<2x32xf32>
    %c24 = arith.constant 24 : index
    %11 = memref.load %arg3[%c24] : memref<32xf32, #tpu.memory_space<smem>>
    %12 = vector.broadcast %11 : f32 to vector<2x32xf32>
    %13 = arith.mulf %1, %12 : vector<2x32xf32>
    %c0_3 = arith.constant 0 : index
    %c1 = arith.constant 1 : index
    %c0_4 = arith.constant 0 : index
    %14 = vector.load %arg4[%c0_3, %c1, %c0_4] : memref<2x8x32xf32, #tpu.memory_space<vmem>>, vector<2x1x32xf32>
    %15 = vector.shape_cast %14 : vector<2x1x32xf32> to vector<2x32xf32>
    %c1_5 = arith.constant 1 : index
    %16 = memref.load %arg3[%c1_5] : memref<32xf32, #tpu.memory_space<smem>>
    %17 = vector.broadcast %16 : f32 to vector<2x32xf32>
    %18 = arith.mulf %15, %17 : vector<2x32xf32>
    %19 = arith.addf %4, %18 : vector<2x32xf32>
    %c9 = arith.constant 9 : index
    %20 = memref.load %arg3[%c9] : memref<32xf32, #tpu.memory_space<smem>>
    %21 = vector.broadcast %20 : f32 to vector<2x32xf32>
    %22 = arith.mulf %15, %21 : vector<2x32xf32>
    %23 = arith.addf %7, %22 : vector<2x32xf32>
    %c17 = arith.constant 17 : index
    %24 = memref.load %arg3[%c17] : memref<32xf32, #tpu.memory_space<smem>>
    %25 = vector.broadcast %24 : f32 to vector<2x32xf32>
    %26 = arith.mulf %15, %25 : vector<2x32xf32>
    %27 = arith.addf %10, %26 : vector<2x32xf32>
    %c25 = arith.constant 25 : index
    %28 = memref.load %arg3[%c25] : memref<32xf32, #tpu.memory_space<smem>>
    %29 = vector.broadcast %28 : f32 to vector<2x32xf32>
    %30 = arith.mulf %15, %29 : vector<2x32xf32>
    %31 = arith.addf %13, %30 : vector<2x32xf32>
    %c0_6 = arith.constant 0 : index
    %c2 = arith.constant 2 : index
    %c0_7 = arith.constant 0 : index
    %32 = vector.load %arg4[%c0_6, %c2, %c0_7] : memref<2x8x32xf32, #tpu.memory_space<vmem>>, vector<2x1x32xf32>
    %33 = vector.shape_cast %32 : vector<2x1x32xf32> to vector<2x32xf32>
    %c2_8 = arith.constant 2 : index
    %34 = memref.load %arg3[%c2_8] : memref<32xf32, #tpu.memory_space<smem>>
    %35 = vector.broadcast %34 : f32 to vector<2x32xf32>
    %36 = arith.mulf %33, %35 : vector<2x32xf32>
    %37 = arith.addf %19, %36 : vector<2x32xf32>
    %c10 = arith.constant 10 : index
    %38 = memref.load %arg3[%c10] : memref<32xf32, #tpu.memory_space<smem>>
    %39 = vector.broadcast %38 : f32 to vector<2x32xf32>
    %40 = arith.mulf %33, %39 : vector<2x32xf32>
    %41 = arith.addf %23, %40 : vector<2x32xf32>
    %c18 = arith.constant 18 : index
    %42 = memref.load %arg3[%c18] : memref<32xf32, #tpu.memory_space<smem>>
    %43 = vector.broadcast %42 : f32 to vector<2x32xf32>
    %44 = arith.mulf %33, %43 : vector<2x32xf32>
    %45 = arith.addf %27, %44 : vector<2x32xf32>
    %c26 = arith.constant 26 : index
    %46 = memref.load %arg3[%c26] : memref<32xf32, #tpu.memory_space<smem>>
    %47 = vector.broadcast %46 : f32 to vector<2x32xf32>
    %48 = arith.mulf %33, %47 : vector<2x32xf32>
    %49 = arith.addf %31, %48 : vector<2x32xf32>
    %c0_9 = arith.constant 0 : index
    %c3 = arith.constant 3 : index
    %c0_10 = arith.constant 0 : index
    %50 = vector.load %arg4[%c0_9, %c3, %c0_10] : memref<2x8x32xf32, #tpu.memory_space<vmem>>, vector<2x1x32xf32>
    %51 = vector.shape_cast %50 : vector<2x1x32xf32> to vector<2x32xf32>
    %c3_11 = arith.constant 3 : index
    %52 = memref.load %arg3[%c3_11] : memref<32xf32, #tpu.memory_space<smem>>
    %53 = vector.broadcast %52 : f32 to vector<2x32xf32>
    %54 = arith.mulf %51, %53 : vector<2x32xf32>
    %55 = arith.addf %37, %54 : vector<2x32xf32>
    %c11 = arith.constant 11 : index
    %56 = memref.load %arg3[%c11] : memref<32xf32, #tpu.memory_space<smem>>
    %57 = vector.broadcast %56 : f32 to vector<2x32xf32>
    %58 = arith.mulf %51, %57 : vector<2x32xf32>
    %59 = arith.addf %41, %58 : vector<2x32xf32>
    %c19 = arith.constant 19 : index
    %60 = memref.load %arg3[%c19] : memref<32xf32, #tpu.memory_space<smem>>
    %61 = vector.broadcast %60 : f32 to vector<2x32xf32>
    %62 = arith.mulf %51, %61 : vector<2x32xf32>
    %63 = arith.addf %45, %62 : vector<2x32xf32>
    %c27 = arith.constant 27 : index
    %64 = memref.load %arg3[%c27] : memref<32xf32, #tpu.memory_space<smem>>
    %65 = vector.broadcast %64 : f32 to vector<2x32xf32>
    %66 = arith.mulf %51, %65 : vector<2x32xf32>
    %67 = arith.addf %49, %66 : vector<2x32xf32>
    %c0_12 = arith.constant 0 : index
    %c4 = arith.constant 4 : index
    %c0_13 = arith.constant 0 : index
    %68 = vector.load %arg4[%c0_12, %c4, %c0_13] : memref<2x8x32xf32, #tpu.memory_space<vmem>>, vector<2x1x32xf32>
    %69 = vector.shape_cast %68 : vector<2x1x32xf32> to vector<2x32xf32>
    %c4_14 = arith.constant 4 : index
    %70 = memref.load %arg3[%c4_14] : memref<32xf32, #tpu.memory_space<smem>>
    %71 = vector.broadcast %70 : f32 to vector<2x32xf32>
    %72 = arith.mulf %69, %71 : vector<2x32xf32>
    %73 = arith.addf %55, %72 : vector<2x32xf32>
    %c12 = arith.constant 12 : index
    %74 = memref.load %arg3[%c12] : memref<32xf32, #tpu.memory_space<smem>>
    %75 = vector.broadcast %74 : f32 to vector<2x32xf32>
    %76 = arith.mulf %69, %75 : vector<2x32xf32>
    %77 = arith.addf %59, %76 : vector<2x32xf32>
    %c20 = arith.constant 20 : index
    %78 = memref.load %arg3[%c20] : memref<32xf32, #tpu.memory_space<smem>>
    %79 = vector.broadcast %78 : f32 to vector<2x32xf32>
    %80 = arith.mulf %69, %79 : vector<2x32xf32>
    %81 = arith.addf %63, %80 : vector<2x32xf32>
    %c28 = arith.constant 28 : index
    %82 = memref.load %arg3[%c28] : memref<32xf32, #tpu.memory_space<smem>>
    %83 = vector.broadcast %82 : f32 to vector<2x32xf32>
    %84 = arith.mulf %69, %83 : vector<2x32xf32>
    %85 = arith.addf %67, %84 : vector<2x32xf32>
    %c0_15 = arith.constant 0 : index
    %c5 = arith.constant 5 : index
    %c0_16 = arith.constant 0 : index
    %86 = vector.load %arg4[%c0_15, %c5, %c0_16] : memref<2x8x32xf32, #tpu.memory_space<vmem>>, vector<2x1x32xf32>
    %87 = vector.shape_cast %86 : vector<2x1x32xf32> to vector<2x32xf32>
    %c5_17 = arith.constant 5 : index
    %88 = memref.load %arg3[%c5_17] : memref<32xf32, #tpu.memory_space<smem>>
    %89 = vector.broadcast %88 : f32 to vector<2x32xf32>
    %90 = arith.mulf %87, %89 : vector<2x32xf32>
    %91 = arith.addf %73, %90 : vector<2x32xf32>
    %c13 = arith.constant 13 : index
    %92 = memref.load %arg3[%c13] : memref<32xf32, #tpu.memory_space<smem>>
    %93 = vector.broadcast %92 : f32 to vector<2x32xf32>
    %94 = arith.mulf %87, %93 : vector<2x32xf32>
    %95 = arith.addf %77, %94 : vector<2x32xf32>
    %c21 = arith.constant 21 : index
    %96 = memref.load %arg3[%c21] : memref<32xf32, #tpu.memory_space<smem>>
    %97 = vector.broadcast %96 : f32 to vector<2x32xf32>
    %98 = arith.mulf %87, %97 : vector<2x32xf32>
    %99 = arith.addf %81, %98 : vector<2x32xf32>
    %c29 = arith.constant 29 : index
    %100 = memref.load %arg3[%c29] : memref<32xf32, #tpu.memory_space<smem>>
    %101 = vector.broadcast %100 : f32 to vector<2x32xf32>
    %102 = arith.mulf %87, %101 : vector<2x32xf32>
    %103 = arith.addf %85, %102 : vector<2x32xf32>
    %c0_18 = arith.constant 0 : index
    %c6 = arith.constant 6 : index
    %c0_19 = arith.constant 0 : index
    %104 = vector.load %arg4[%c0_18, %c6, %c0_19] : memref<2x8x32xf32, #tpu.memory_space<vmem>>, vector<2x1x32xf32>
    %105 = vector.shape_cast %104 : vector<2x1x32xf32> to vector<2x32xf32>
    %c6_20 = arith.constant 6 : index
    %106 = memref.load %arg3[%c6_20] : memref<32xf32, #tpu.memory_space<smem>>
    %107 = vector.broadcast %106 : f32 to vector<2x32xf32>
    %108 = arith.mulf %105, %107 : vector<2x32xf32>
    %109 = arith.addf %91, %108 : vector<2x32xf32>
    %c14 = arith.constant 14 : index
    %110 = memref.load %arg3[%c14] : memref<32xf32, #tpu.memory_space<smem>>
    %111 = vector.broadcast %110 : f32 to vector<2x32xf32>
    %112 = arith.mulf %105, %111 : vector<2x32xf32>
    %113 = arith.addf %95, %112 : vector<2x32xf32>
    %c22 = arith.constant 22 : index
    %114 = memref.load %arg3[%c22] : memref<32xf32, #tpu.memory_space<smem>>
    %115 = vector.broadcast %114 : f32 to vector<2x32xf32>
    %116 = arith.mulf %105, %115 : vector<2x32xf32>
    %117 = arith.addf %99, %116 : vector<2x32xf32>
    %c30 = arith.constant 30 : index
    %118 = memref.load %arg3[%c30] : memref<32xf32, #tpu.memory_space<smem>>
    %119 = vector.broadcast %118 : f32 to vector<2x32xf32>
    %120 = arith.mulf %105, %119 : vector<2x32xf32>
    %121 = arith.addf %103, %120 : vector<2x32xf32>
    %c0_21 = arith.constant 0 : index
    %c7 = arith.constant 7 : index
    %c0_22 = arith.constant 0 : index
    %122 = vector.load %arg4[%c0_21, %c7, %c0_22] : memref<2x8x32xf32, #tpu.memory_space<vmem>>, vector<2x1x32xf32>
    %123 = vector.shape_cast %122 : vector<2x1x32xf32> to vector<2x32xf32>
    %c7_23 = arith.constant 7 : index
    %124 = memref.load %arg3[%c7_23] : memref<32xf32, #tpu.memory_space<smem>>
    %125 = vector.broadcast %124 : f32 to vector<2x32xf32>
    %126 = arith.mulf %123, %125 : vector<2x32xf32>
    %127 = arith.addf %109, %126 : vector<2x32xf32>
    %c15 = arith.constant 15 : index
    %128 = memref.load %arg3[%c15] : memref<32xf32, #tpu.memory_space<smem>>
    %129 = vector.broadcast %128 : f32 to vector<2x32xf32>
    %130 = arith.mulf %123, %129 : vector<2x32xf32>
    %131 = arith.addf %113, %130 : vector<2x32xf32>
    %c23 = arith.constant 23 : index
    %132 = memref.load %arg3[%c23] : memref<32xf32, #tpu.memory_space<smem>>
    %133 = vector.broadcast %132 : f32 to vector<2x32xf32>
    %134 = arith.mulf %123, %133 : vector<2x32xf32>
    %135 = arith.addf %117, %134 : vector<2x32xf32>
    %c31 = arith.constant 31 : index
    %136 = memref.load %arg3[%c31] : memref<32xf32, #tpu.memory_space<smem>>
    %137 = vector.broadcast %136 : f32 to vector<2x32xf32>
    %138 = arith.mulf %123, %137 : vector<2x32xf32>
    %139 = arith.addf %121, %138 : vector<2x32xf32>
    %140 = vector.shape_cast %127 : vector<2x32xf32> to vector<2x1x32xf32>
    %141 = vector.shape_cast %131 : vector<2x32xf32> to vector<2x1x32xf32>
    %142 = vector.shape_cast %135 : vector<2x32xf32> to vector<2x1x32xf32>
    %143 = vector.shape_cast %139 : vector<2x32xf32> to vector<2x1x32xf32>
    %144 = tpu.concatenate %140, %141, %142, %143 in 1 : vector<2x1x32xf32>, vector<2x1x32xf32>, vector<2x1x32xf32>, vector<2x1x32xf32> -> vector<2x4x32xf32>
    %c0_24 = arith.constant 0 : index
    %c0_25 = arith.constant 0 : index
    %c0_26 = arith.constant 0 : index
    %145 = vector.load %arg5[%c0_24, %c0_25, %c0_26] : memref<2x4x32xf32, #tpu.memory_space<vmem>>, vector<2x4x32xf32>
    tpu.vector_store %arg5[%c0_24, %c0_25, %c0_26], %144 {strides = array<i32>} : memref<2x4x32xf32, #tpu.memory_space<vmem>>, vector<2x4x32xf32>,
    return
  }
  func.func @transform_0(%arg0: i32, %arg1: i32, %arg2: i32) -> i32 {
    %c0_i32 = arith.constant 0 : i32
    %c0_i32_0 = arith.constant 0 : i32
    return %c0_i32 : i32
  }
  func.func @transform_1(%arg0: i32, %arg1: i32, %arg2: i32) -> (i32, i32, i32) {
    %c0_i32 = arith.constant 0 : i32
    return %arg0, %arg2, %arg1 : i32, i32, i32
  }
  func.func @transform_2(%arg0: i32, %arg1: i32, %arg2: i32) -> (i32, i32, i32) {
    %c0_i32 = arith.constant 0 : i32
    %c0_i32_0 = arith.constant 0 : i32
    return %arg0, %c0_i32, %arg1 : i32, i32, i32
  }
}

</mosaic_0001>

<llo_original>
// kernel: tpu_custom_call.1
$region0: #{tpu_custom_call.1}
  #allocation0 [shape = 'u32[]', space=smem, size = 0x4, offset = 0x4, fixed_abs, tag = 'smem constant byte address 0x4 - core index']
  #allocation1 [shape = 'u32[72,128]{1,0:T(1,128)}', space=vmem, size = 0x9000, scoped, tag = 'internal scratch']
  %s0 = inlined_call_operand.hbm [shape: f32[32], index: 0, kind: input, shape index: {}]
  %s1 = inlined_call_operand.hbm [shape: f32[8,8,32], index: 1, kind: input, shape index: {}]
  %s2 = inlined_call_operand.hbm [shape: f32[8,4,32], index: 2, kind: output, shape index: {}]
  %s3 = sld [smem:[#allocation0]]
  $region49: #{tpu_custom_call.1} parent=0
    _
  %s5 = ssub.s32 1, %s3
  %s6 = scalar_select 0, %s5, %s3
  $region1: #{tpu_custom_call.1} parent=0
    #allocation2 [shape = 'u8[512]{0}', space=smem, size = 0x200, scoped, tag = 'input window, operand 0, single buffered']
    #allocation3 [shape = 's32[2]{0}', space=sflag, size = 0x8, scoped, tag = 'scoped memory for tpu_custom_call.1']
    #allocation4 [shape = 's32[2]{0}', space=sflag, size = 0x8, scoped, tag = 'scoped memory for tpu_custom_call.1']
    #allocation5 [shape = 's32[2]{0}', space=sflag, size = 0x8, scoped, tag = 'scoped memory for tpu_custom_call.1']
    #allocation6 [shape = 'u8[16384]{0}', space=vmem, size = 0x4000, scoped, tag = 'input window, operand 1']
    #allocation7 [shape = 'u8[8192]{0}', space=vmem, size = 0x2000, scoped, tag = 'output window, operand 0']
    %7 = vsyncpa [#allocation5], 0
    %8 = vsyncpa [#allocation3], 0
    %s9 = scalar_lea.sflag [#allocation3], 1
    %10 = vsyncpa %s9, 0
    %11 = vsyncpa [#allocation4], 0
    %s12 = scalar_lea.sflag [#allocation4], 1
    %13 = vsyncpa %s12, 0
    loop: start=0, step=1, limit=6
    $region2: #{tpu_custom_call.1} parent=1 // loop_pre_header
      _
    $region3: #{tpu_custom_call.1} parent=1 // loop_header
      %s15 = sphi 0, %s19
      %p16 = scmp.ge.s32.totalorder %s15, 6
      %s22 = sphi 0, %s41
      %s23 = sphi 0, %s37
      %s24 = sphi 0, %s33
      %s25 = sphi 0, %s22
      %s26 = sphi 0, %s23
      %s27 = sphi 0, %s24
      %s28 = sphi 0, %s25
      %s29 = sphi 0, %s26
      %s30 = sphi 0, %s27
      %s42 = sphi 0, %s42
      %s44 = sphi 0, %s42
      %s45 = sphi 0, %s44
      %s59 = sphi 0, %s45
      %s69 = sphi 0, %s71
      %s72 = sphi 0, %s69
      %s73 = sphi 0, %s72
      %s89 = sphi 0, %s73
      %s97 = sphi 0, %s99
      %s100 = sphi 0, %s97
      %s101 = sphi 0, %s100
      %s117 = sphi 0, %s101
    $region4: #{tpu_custom_call.1} parent=1 // loop_header_branch
      %18 = sbr.rel (%p16) target = $region8
    $region5: #{tpu_custom_call.1} parent=1 // loop_body
      %s20 = ssub.s32 %s15, 1
      %s21 = ssub.s32 %s15, 2
      %s31 = sadd.s32 1, %s24
      %p32 = scmp.ge.s32.totalorder %s31, 1
      %s33 = scalar_select %p32, 0, %s31
      %s34 = sadd.s32 1, %s23
      %s35 = scalar_select %p32, %s34, %s23
      %p36 = scmp.ge.s32.totalorder %s35, 1
      %s37 = scalar_select %p36, 0, %s35
      %s38 = sadd.s32 1, %s22
      %s39 = scalar_select %p36, %s38, %s22
      %p40 = scmp.ge.s32.totalorder %s39, 4
      %s41 = scalar_select %p40, 0, %s39
      %s43 = sadd.s32 %s42, 1
      %p46 = scmp.eq.s32.totalorder %s15, 3
      %p47 = scmp.ne.s32.totalorder %s42, %s44
      %p48 = scmp.eq.s32.totalorder %s15, 0
      %p49 = por %p47, %p48
      %p50 = scmp.ne.s32.totalorder %s42, %s44
      %p51 = scmp.eq.s32.totalorder %s20, 3
      %p52 = por %p50, %p51
      %p53 = scmp.ne.s32.totalorder %s44, %s45
      %p54 = scmp.eq.s32.totalorder %s20, 0
      %p55 = por %p53, %p54
      %p56 = scmp.ne.s32.totalorder %s44, %s45
      %p57 = scmp.eq.s32.totalorder %s21, 3
      %p58 = por %p56, %p57
      %p60 = scmp.ne.s32.totalorder %s45, %s59
      %p61 = scmp.eq.s32.totalorder %s21, 0
      %p62 = por %p60, %p61
      %s63 = ssub.s32 %s22, %s41
      %s64 = ssub.s32 %s24, %s33
      %s65 = sor.u32 %s63, %s64
      %s66 = ssub.s32 %s23, %s37
      %s67 = sor.u32 %s65, %s66
      %p68 = scmp.eq.s32.totalorder %s67, 0
      %s70 = sadd.s32 %s69, 1
      %s71 = scalar_select %p68, %s69, %s70
      %p74 = pneg %p68
      %p75 = scmp.eq.s32.totalorder %s15, 3
      %p76 = por %p74, %p75
      %p77 = scmp.ne.s32.totalorder %s69, %s72
      %p78 = scmp.eq.s32.totalorder %s15, 0
      %p79 = por %p77, %p78
      %p80 = scmp.ne.s32.totalorder %s69, %s72
      %p81 = scmp.eq.s32.totalorder %s20, 3
      %p82 = por %p80, %p81
      %p83 = scmp.ne.s32.totalorder %s72, %s73
      %p84 = scmp.eq.s32.totalorder %s20, 0
      %p85 = por %p83, %p84
      %p86 = scmp.ne.s32.totalorder %s72, %s73
      %p87 = scmp.eq.s32.totalorder %s21, 3
      %p88 = por %p86, %p87
      %p90 = scmp.ne.s32.totalorder %s73, %s89
      %p91 = scmp.eq.s32.totalorder %s21, 0
      %p92 = por %p90, %p91
      %s93 = ssub.s32 %s22, %s41
      %s94 = ssub.s32 %s23, %s37
      %s95 = sor.u32 %s93, %s94
      %p96 = scmp.eq.s32.totalorder %s95, 0
      %s98 = sadd.s32 %s97, 1
      %s99 = scalar_select %p96, %s97, %s98
      %p102 = pneg %p96
      %p103 = scmp.eq.s32.totalorder %s15, 3
      %p104 = por %p102, %p103
      %p105 = scmp.ne.s32.totalorder %s97, %s100
      %p106 = scmp.eq.s32.totalorder %s15, 0
      %p107 = por %p105, %p106
      %p108 = scmp.ne.s32.totalorder %s97, %s100
      %p109 = scmp.eq.s32.totalorder %s20, 3
      %p110 = por %p108, %p109
      %p111 = scmp.ne.s32.totalorder %s100, %s101
      %p112 = scmp.eq.s32.totalorder %s20, 0
      %p113 = por %p111, %p112
      %p114 = scmp.ne.s32.totalorder %s100, %s101
      %p115 = scmp.eq.s32.totalorder %s21, 3
      %p116 = por %p114, %p115
      %p118 = scmp.ne.s32.totalorder %s101, %s117
      %p119 = scmp.eq.s32.totalorder %s21, 0
      %p120 = por %p118, %p119
      %p121 = scmp.le.s32.totalorder 1, %s15
      %p122 = scmp.lt.s32.totalorder %s15, 5
      %p123 = pnand %p121, %p122
      %p124 = pneg %p123
      // Predicated region
      $region9: #{tpu_custom_call.1} parent=5 // pred_check
        _
      $region10: #{tpu_custom_call.1} parent=5 // pred_check_branch
        %126 = sbr.rel (%p123) target = $region12
      $region11: #{tpu_custom_call.1} parent=5 // pred_region
        %s127 = ssub.s32 %s15, 1
        // Predicated region
        $region13: #{tpu_custom_call.1} parent=11 // pred_check
          %p128 = pneg %p55
        $region14: #{tpu_custom_call.1} parent=11 // pred_check_branch
          %130 = sbr.rel (%p128) target = $region16
        $region15: #{tpu_custom_call.1} parent=11 // pred_region
          %132 = vsyncadd [#allocation5], 0
          %s134 = sshll.u32 %s0, 4
          %s135 = int_to_ptr.hbm [resolvable:$true] %s134
          %137 = dma.hbm_to_smem %s135, 16, [#allocation2], [#allocation5]
        $region16: #{tpu_custom_call.1} parent=11 // pred_fallthru
          _
      $region12: #{tpu_custom_call.1} parent=5 // pred_fallthru
        _
      %p138 = scmp.lt.s32.totalorder %s15, 4
      // Predicated region
      $region17: #{tpu_custom_call.1} parent=5 // pred_check
        %p139 = pneg %p138
      $region18: #{tpu_custom_call.1} parent=5 // pred_check_branch
        %141 = sbr.rel (%p139) target = $region20
      $region19: #{tpu_custom_call.1} parent=5 // pred_region
        // Predicated region
        $region21: #{tpu_custom_call.1} parent=19 // pred_check
          %p142 = pneg %p79
        $region22: #{tpu_custom_call.1} parent=19 // pred_check_branch
          %144 = sbr.rel (%p142) target = $region24
        $region23: #{tpu_custom_call.1} parent=19 // pred_region
          %s145 = sand.u32 %s69, 1
          %s146 = scalar_lea.sflag [#allocation3], %s145
          %s147 = sand.u32 %s69, 1
          %s148 = smul.addr %s147, 16
          %s149 = scalar_lea.vmem [#allocation6], %s148
          %s150 = smul.u32 2, %s22
          %152 = vsyncadd %s146, 0
          %s153 = sadd.s32 %s23, %s24
          %s154 = sadd.s32 %s153, %s150
          %s155 = smul.addr %s154, 8
          %s156 = scalar_lea.hbm %s1, %s155
          %s157 = sshll.u32 %s156, 4
          %s158 = int_to_ptr.hbm [resolvable:$true] %s157
          %s159 = sshll.u32 %s149, 4
          %s160 = int_to_ptr.vmem [resolvable:$true] %s159
          %165 = dma.hbm_to_vmem [thread:$0]  %s158, 256, %s160, %s146, 128, 128, 8
        $region24: #{tpu_custom_call.1} parent=19 // pred_fallthru
          _
      $region20: #{tpu_custom_call.1} parent=5 // pred_fallthru
        _
      %p166 = scmp.le.s32.totalorder 1, %s15
      %p167 = scmp.lt.s32.totalorder %s15, 5
      %p168 = pnand %p166, %p167
      %p169 = pneg %p168
      // Predicated region
      $region25: #{tpu_custom_call.1} parent=5 // pred_check
        _
      $region26: #{tpu_custom_call.1} parent=5 // pred_check_branch
        %171 = sbr.rel (%p168) target = $region28
      $region27: #{tpu_custom_call.1} parent=5 // pred_region
        %s172 = ssub.s32 %s15, 1
        // Predicated region
        $region29: #{tpu_custom_call.1} parent=27 // pred_check
          %p173 = pneg %p55
        $region30: #{tpu_custom_call.1} parent=27 // pred_check_branch
          %175 = sbr.rel (%p173) target = $region32
        $region31: #{tpu_custom_call.1} parent=27 // pred_region
          %177 = dma.done [#allocation5], 16
        $region32: #{tpu_custom_call.1} parent=27 // pred_fallthru
          _
        %s178 = sand.u32 %s72, 1
        %s179 = scalar_lea.sflag [#allocation3], %s178
        %s180 = sand.u32 %s72, 1
        %s181 = smul.addr %s180, 16
        %s182 = scalar_lea.vmem [#allocation6], %s181
        // Predicated region
        $region33: #{tpu_custom_call.1} parent=27 // pred_check
          %p183 = pneg %p85
        $region34: #{tpu_custom_call.1} parent=27 // pred_check_branch
          %185 = sbr.rel (%p183) target = $region36
        $region35: #{tpu_custom_call.1} parent=27 // pred_region
          %187 = dma.done %s179, 256
        $region36: #{tpu_custom_call.1} parent=27 // pred_fallthru
          _
        %188 = sfence
        %p189 = pneg %p55
        %p190 = pneg %p52
        %s191 = sand.u32 %s72, 1
        %s192 = scalar_lea.sflag [#allocation3], %s191
        %s193 = sand.u32 %s72, 1
        %s194 = smul.addr %s193, 16
        %s195 = scalar_lea.vmem [#allocation6], %s194
        %p196 = pneg %p85
        %p197 = pneg %p82
        %p198 = pneg %p113
        %p199 = pneg %p110
        %s200 = sand.u32 %s100, 1
        %s201 = scalar_lea.sflag [#allocation4], %s200
        %s202 = sand.u32 %s100, 1
        %s203 = smul.addr %s202, 8
        %s204 = scalar_lea.vmem [#allocation7], %s203
        %s205 = smul.u32 2, %s25
        %s206 = smul.u32 2, %s25
        %v207 = vld [vmem:[%s182] sm:$0x1]
        %v208 = vld [vmem:[%s182 + $0x8] sm:$0x1]
        %s209 = sld [smem:[#allocation2]]
        %v210 = vstv %s209
        %v211 = vmul.f32 %v207, %v210
        %v212 = vmul.f32 %v208, %v210
        %s213 = sld [smem:[#allocation2 + $0x8]]
        %v214 = vstv %s213
        %v215 = vmul.f32 %v207, %v214
        %v216 = vmul.f32 %v208, %v214
        %s217 = sld [smem:[#allocation2 + $0x10]]
        %v218 = vstv %s217
        %v219 = vmul.f32 %v207, %v218
        %v220 = vmul.f32 %v208, %v218
        %s221 = sld [smem:[#allocation2 + $0x18]]
        %v222 = vstv %s221
        %v223 = vmul.f32 %v207, %v222
        %v224 = vmul.f32 %v208, %v222
        %v225 = vld [vmem:[%s182 + $0x1] sm:$0x1]
        %v226 = vld [vmem:[%s182 + $0x9] sm:$0x1]
        %s227 = sld [smem:[#allocation2 + $0x1]]
        %v228 = vstv %s227
        %v229 = vmul.f32 %v225, %v228
        %v230 = vmul.f32 %v226, %v228
        %v231 = vadd.f32 %v211, %v229
        %v232 = vadd.f32 %v212, %v230
        %s233 = sld [smem:[#allocation2 + $0x9]]
        %v234 = vstv %s233
        %v235 = vmul.f32 %v225, %v234
        %v236 = vmul.f32 %v226, %v234
        %v237 = vadd.f32 %v215, %v235
        %v238 = vadd.f32 %v216, %v236
        %s239 = sld [smem:[#allocation2 + $0x11]]
        %v240 = vstv %s239
        %v241 = vmul.f32 %v225, %v240
        %v242 = vmul.f32 %v226, %v240
        %v243 = vadd.f32 %v219, %v241
        %v244 = vadd.f32 %v220, %v242
        %s245 = sld [smem:[#allocation2 + $0x19]]
        %v246 = vstv %s245
        %v247 = vmul.f32 %v225, %v246
        %v248 = vmul.f32 %v226, %v246
        %v249 = vadd.f32 %v223, %v247
        %v250 = vadd.f32 %v224, %v248
        %v251 = vld [vmem:[%s182 + $0x2] sm:$0x1]
        %v252 = vld [vmem:[%s182 + $0xa] sm:$0x1]
        %s253 = sld [smem:[#allocation2 + $0x2]]
        %v254 = vstv %s253
        %v255 = vmul.f32 %v251, %v254
        %v256 = vmul.f32 %v252, %v254
        %v257 = vadd.f32 %v231, %v255
        %v258 = vadd.f32 %v232, %v256
        %s259 = sld [smem:[#allocation2 + $0xa]]
        %v260 = vstv %s259
        %v261 = vmul.f32 %v251, %v260
        %v262 = vmul.f32 %v252, %v260
        %v263 = vadd.f32 %v237, %v261
        %v264 = vadd.f32 %v238, %v262
        %s265 = sld [smem:[#allocation2 + $0x12]]
        %v266 = vstv %s265
        %v267 = vmul.f32 %v251, %v266
        %v268 = vmul.f32 %v252, %v266
        %v269 = vadd.f32 %v243, %v267
        %v270 = vadd.f32 %v244, %v268
        %s271 = sld [smem:[#allocation2 + $0x1a]]
        %v272 = vstv %s271
        %v273 = vmul.f32 %v251, %v272
        %v274 = vmul.f32 %v252, %v272
        %v275 = vadd.f32 %v249, %v273
        %v276 = vadd.f32 %v250, %v274
        %v277 = vld [vmem:[%s182 + $0x3] sm:$0x1]
        %v278 = vld [vmem:[%s182 + $0xb] sm:$0x1]
        %s279 = sld [smem:[#allocation2 + $0x3]]
        %v280 = vstv %s279
        %v281 = vmul.f32 %v277, %v280
        %v282 = vmul.f32 %v278, %v280
        %v283 = vadd.f32 %v257, %v281
        %v284 = vadd.f32 %v258, %v282
        %s285 = sld [smem:[#allocation2 + $0xb]]
        %v286 = vstv %s285
        %v287 = vmul.f32 %v277, %v286
        %v288 = vmul.f32 %v278, %v286
        %v289 = vadd.f32 %v263, %v287
        %v290 = vadd.f32 %v264, %v288
        %s291 = sld [smem:[#allocation2 + $0x13]]
        %v292 = vstv %s291
        %v293 = vmul.f32 %v277, %v292
        %v294 = vmul.f32 %v278, %v292
        %v295 = vadd.f32 %v269, %v293
        %v296 = vadd.f32 %v270, %v294
        %s297 = sld [smem:[#allocation2 + $0x1b]]
        %v298 = vstv %s297
        %v299 = vmul.f32 %v277, %v298
        %v300 = vmul.f32 %v278, %v298
        %v301 = vadd.f32 %v275, %v299
        %v302 = vadd.f32 %v276, %v300
        %v303 = vld [vmem:[%s182 + $0x4] sm:$0x1]
        %v304 = vld [vmem:[%s182 + $0xc] sm:$0x1]
        %s305 = sld [smem:[#allocation2 + $0x4]]
        %v306 = vstv %s305
        %v307 = vmul.f32 %v303, %v306
        %v308 = vmul.f32 %v304, %v306
        %v309 = vadd.f32 %v283, %v307
        %v310 = vadd.f32 %v284, %v308
        %s311 = sld [smem:[#allocation2 + $0xc]]
        %v312 = vstv %s311
        %v313 = vmul.f32 %v303, %v312
        %v314 = vmul.f32 %v304, %v312
        %v315 = vadd.f32 %v289, %v313
        %v316 = vadd.f32 %v290, %v314
        %s317 = sld [smem:[#allocation2 + $0x14]]
        %v318 = vstv %s317
        %v319 = vmul.f32 %v303, %v318
        %v320 = vmul.f32 %v304, %v318
        %v321 = vadd.f32 %v295, %v319
        %v322 = vadd.f32 %v296, %v320
        %s323 = sld [smem:[#allocation2 + $0x1c]]
        %v324 = vstv %s323
        %v325 = vmul.f32 %v303, %v324
        %v326 = vmul.f32 %v304, %v324
        %v327 = vadd.f32 %v301, %v325
        %v328 = vadd.f32 %v302, %v326
        %v329 = vld [vmem:[%s182 + $0x5] sm:$0x1]
        %v330 = vld [vmem:[%s182 + $0xd] sm:$0x1]
        %s331 = sld [smem:[#allocation2 + $0x5]]
        %v332 = vstv %s331
        %v333 = vmul.f32 %v329, %v332
        %v334 = vmul.f32 %v330, %v332
        %v335 = vadd.f32 %v309, %v333
        %v336 = vadd.f32 %v310, %v334
        %s337 = sld [smem:[#allocation2 + $0xd]]
        %v338 = vstv %s337
        %v339 = vmul.f32 %v329, %v338
        %v340 = vmul.f32 %v330, %v338
        %v341 = vadd.f32 %v315, %v339
        %v342 = vadd.f32 %v316, %v340
        %s343 = sld [smem:[#allocation2 + $0x15]]
        %v344 = vstv %s343
        %v345 = vmul.f32 %v329, %v344
        %v346 = vmul.f32 %v330, %v344
        %v347 = vadd.f32 %v321, %v345
        %v348 = vadd.f32 %v322, %v346
        %s349 = sld [smem:[#allocation2 + $0x1d]]
        %v350 = vstv %s349
        %v351 = vmul.f32 %v329, %v350
        %v352 = vmul.f32 %v330, %v350
        %v353 = vadd.f32 %v327, %v351
        %v354 = vadd.f32 %v328, %v352
        %v355 = vld [vmem:[%s182 + $0x6] sm:$0x1]
        %v356 = vld [vmem:[%s182 + $0xe] sm:$0x1]
        %s357 = sld [smem:[#allocation2 + $0x6]]
        %v358 = vstv %s357
        %v359 = vmul.f32 %v355, %v358
        %v360 = vmul.f32 %v356, %v358
        %v361 = vadd.f32 %v335, %v359
        %v362 = vadd.f32 %v336, %v360
        %s363 = sld [smem:[#allocation2 + $0xe]]
        %v364 = vstv %s363
        %v365 = vmul.f32 %v355, %v364
        %v366 = vmul.f32 %v356, %v364
        %v367 = vadd.f32 %v341, %v365
        %v368 = vadd.f32 %v342, %v366
        %s369 = sld [smem:[#allocation2 + $0x16]]
        %v370 = vstv %s369
        %v371 = vmul.f32 %v355, %v370
        %v372 = vmul.f32 %v356, %v370
        %v373 = vadd.f32 %v347, %v371
        %v374 = vadd.f32 %v348, %v372
        %s375 = sld [smem:[#allocation2 + $0x1e]]
        %v376 = vstv %s375
        %v377 = vmul.f32 %v355, %v376
        %v378 = vmul.f32 %v356, %v376
        %v379 = vadd.f32 %v353, %v377
        %v380 = vadd.f32 %v354, %v378
        %v381 = vld [vmem:[%s182 + $0x7] sm:$0x1]
        %v382 = vld [vmem:[%s182 + $0xf] sm:$0x1]
        %s383 = sld [smem:[#allocation2 + $0x7]]
        %v384 = vstv %s383
        %v385 = vmul.f32 %v381, %v384
        %v386 = vmul.f32 %v382, %v384
        %v387 = vadd.f32 %v361, %v385
        %v388 = vadd.f32 %v362, %v386
        %s389 = sld [smem:[#allocation2 + $0xf]]
        %v390 = vstv %s389
        %v391 = vmul.f32 %v381, %v390
        %v392 = vmul.f32 %v382, %v390
        %v393 = vadd.f32 %v367, %v391
        %v394 = vadd.f32 %v368, %v392
        %s395 = sld [smem:[#allocation2 + $0x17]]
        %v396 = vstv %s395
        %v397 = vmul.f32 %v381, %v396
        %v398 = vmul.f32 %v382, %v396
        %v399 = vadd.f32 %v373, %v397
        %v400 = vadd.f32 %v374, %v398
        %s401 = sld [smem:[#allocation2 + $0x1f]]
        %v402 = vstv %s401
        %v403 = vmul.f32 %v381, %v402
        %v404 = vmul.f32 %v382, %v402
        %v405 = vadd.f32 %v379, %v403
        %v406 = vadd.f32 %v380, %v404
        %v409 = vrot.slane %v393, 7
        %v410 = vrot.slane %v394, 7
        %v415 = vrot.slane %v399, 6
        %v416 = vrot.slane %v400, 6
        %v421 = vrot.slane %v405, 5
        %v422 = vrot.slane %v406, 5
        %vm425 = vcmask 1040384
        %v426 = vsel %vm425, %v387, %v409
        %v427 = vsel %vm425, %v388, %v410
        %vm428 = vcmask 1041408
        %v429 = vsel %vm428, %v426, %v415
        %v430 = vsel %vm428, %v427, %v416
        %vm431 = vcmask 1042432
        %v432 = vsel %vm431, %v429, %v421
        %v433 = vsel %vm431, %v430, %v422
        %vm434 = vcmask 257024
        %435 = vst.msk [vmem:[%s204] sm:$0xf] %vm434, %v432
        %436 = vst.msk [vmem:[%s204 + $0x4] sm:$0xf] %vm434, %v433
        %s437 = sand.u32 %s100, 1
        %s438 = scalar_lea.sflag [#allocation4], %s437
        %s439 = sand.u32 %s100, 1
        %s440 = smul.addr %s439, 8
        %s441 = scalar_lea.vmem [#allocation7], %s440
        // Predicated region
        $region37: #{tpu_custom_call.1} parent=27 // pred_check
          %p442 = pneg %p110
        $region38: #{tpu_custom_call.1} parent=27 // pred_check_branch
          %444 = sbr.rel (%p442) target = $region40
        $region39: #{tpu_custom_call.1} parent=27 // pred_region
          %s445 = smul.u32 2, %s25
          %447 = vsyncadd %s438, 0
          %s448 = sadd.s32 %s26, %s445
          %s449 = smul.addr %s448, 4
          %s450 = scalar_lea.hbm %s2, %s449
          %s451 = sshll.u32 %s441, 4
          %s452 = int_to_ptr.vmem [resolvable:$true] %s451
          %s453 = sshll.u32 %s450, 4
          %s454 = int_to_ptr.hbm [resolvable:$true] %s453
          %459 = dma.vmem_to_hbm [thread:$0]  %s452, 128, %s454, %s438, 64, 64, 4
        $region40: #{tpu_custom_call.1} parent=27 // pred_fallthru
          _
      $region28: #{tpu_custom_call.1} parent=5 // pred_fallthru
        _
      %p460 = scmp.le.s32.totalorder 2, %s15
      // Predicated region
      $region41: #{tpu_custom_call.1} parent=5 // pred_check
        %p461 = pneg %p460
      $region42: #{tpu_custom_call.1} parent=5 // pred_check_branch
        %463 = sbr.rel (%p461) target = $region44
      $region43: #{tpu_custom_call.1} parent=5 // pred_region
        %s464 = ssub.s32 %s15, 2
        // Predicated region
        $region45: #{tpu_custom_call.1} parent=43 // pred_check
          %p465 = pneg %p116
        $region46: #{tpu_custom_call.1} parent=43 // pred_check_branch
          %467 = sbr.rel (%p465) target = $region48
        $region47: #{tpu_custom_call.1} parent=43 // pred_region
          %s468 = sand.u32 %s101, 1
          %s469 = scalar_lea.sflag [#allocation4], %s468
          %s470 = sand.u32 %s101, 1
          %s471 = smul.addr %s470, 8
          %s472 = scalar_lea.vmem [#allocation7], %s471
          %474 = dma.done %s469, 128
        $region48: #{tpu_custom_call.1} parent=43 // pred_fallthru
          _
      $region44: #{tpu_custom_call.1} parent=5 // pred_fallthru
        _
    $region6: #{tpu_custom_call.1} parent=1 // loop_footer
      %s19 = sadd.s32 1, %s15
    $region7: #{tpu_custom_call.1} parent=1 // loop_footer_branch
      %14 = sbr.rel target = $region3
    $region8: #{tpu_custom_call.1} parent=1 // loop_exit
      _
    %475 = vsyncpa [#allocation3], 1
    %s476 = scalar_lea.sflag [#allocation3], 1
    %477 = vsyncpa %s476, 1
    %478 = vsyncpa [#allocation4], 1
    %s479 = scalar_lea.sflag [#allocation4], 1
    %480 = vsyncpa %s479, 1
    %481 = vsyncpa [#allocation5], 1
    %s482 = scalar_lea.sflag [#allocation5], 1
    %483 = vsyncpa %s482, 1

</llo_original>
